<compile_context>
chip_gen: v5e
topology: v5e:2x2
jax: 0.10.0
libtpu: 0.0.40
codegen_flags: <defaults>
</compile_context>

<pallas_src>
import jax
import jax.numpy as jnp
from jax.experimental import pallas as pl
from jax.experimental.pallas import tpu as pltpu


def _round_up(x: int, m: int) -> int:
    return ((x + m - 1) // m) * m


def _dqn_kernel(x_ref, w1_ref, b1_ref, w2_ref, b2_ref,
                w3_ref, b3_ref, w4_ref, b4_ref, o_ref):
    """One batch tile: 4 MXU matmuls (f32) + bias add + ReLU, fused in VMEM."""
    h = x_ref[...]                                                     # f32 [TM, in_dim]

    h = jnp.dot(h, w1_ref[...], preferred_element_type=jnp.float32) + b1_ref[...]
    h = jnp.maximum(h, 0.0)                                            # [TM, 128]

    h = jnp.dot(h, w2_ref[...], preferred_element_type=jnp.float32) + b2_ref[...]
    h = jnp.maximum(h, 0.0)                                            # [TM, 128]

    h = jnp.dot(h, w3_ref[...], preferred_element_type=jnp.float32) + b3_ref[...]
    h = jnp.maximum(h, 0.0)                                            # [TM, 64]

    h = jnp.dot(h, w4_ref[...], preferred_element_type=jnp.float32) + b4_ref[...]
    o_ref[...] = h.astype(o_ref.dtype)                                 # f32 [TM, out_dim]


def dqn_forward(x, params, *, max_tile=512):
    """x: [B, input_dim] float; params: w1..w4 ([in,out]) and b1..b4 ([1,out]), f32."""
    B, in_dim = x.shape
    out_dim = params["w4"].shape[1]

    # Big batch tile (amortizes ~0.35 us per-step overhead); small batches get a
    # single tile rounded to the sublane multiple so padding waste stays <= 7 rows.
    TM = min(max_tile, _round_up(B, 8))
    grid = (pl.cdiv(B, TM),)          # partial last tile handled by Pallas masking

    vmem = pltpu.MemorySpace.VMEM

    def resident(a):
        # Full-array block, constant block index -> DMA'd once, VMEM-resident.
        return pl.BlockSpec(a.shape, lambda i: (0, 0), memory_space=vmem)

    in_specs = [
        pl.BlockSpec((TM, in_dim), lambda i: (i, 0), memory_space=vmem),   # x tile
        resident(params["w1"]), resident(params["b1"]),
        resident(params["w2"]), resident(params["b2"]),
        resident(params["w3"]), resident(params["b3"]),
        resident(params["w4"]), resident(params["b4"]),
    ]
    out_spec = pl.BlockSpec((TM, out_dim), lambda i: (i, 0), memory_space=vmem)

    return pl.pallas_call(
        _dqn_kernel,
        out_shape=jax.ShapeDtypeStruct((B, out_dim), jnp.float32),
        grid=grid,
        in_specs=in_specs,
        out_specs=out_spec,
        compiler_params=pltpu.CompilerParams(
            dimension_semantics=("parallel",),
            # Working set ~1-2 MiB (x/out tiles double-buffered + ~115 KiB weights)
            # -> safely under every generation's VMEM, including v7x's 64 MiB.
            vmem_limit_bytes=32 * 1024 * 1024,
        ),
    )(x.astype(jnp.float32),
      params["w1"], params["b1"], params["w2"], params["b2"],
      params["w3"], params["b3"], params["w4"], params["b4"])


def init_dqn_params(key, input_dim, output_dim):
    """Xavier-uniform weights (as in the PyTorch module), zero biases.

    Weights stored as [in_features, out_features] (transpose of torch layout).
    """
    dims = [(input_dim, 128), (128, 128), (128, 64), (64, output_dim)]
    params = {}
    for i, (fan_in, fan_out) in enumerate(dims, start=1):
        key, sub = jax.random.split(key)
        bound = jnp.sqrt(6.0 / (fan_in + fan_out))
        params[f"w{i}"] = jax.random.uniform(
            sub, (fan_in, fan_out), dtype=jnp.float32,
            minval=-bound, maxval=bound)
        params[f"b{i}"] = jnp.zeros((1, fan_out), dtype=jnp.float32)
    return params


def _reference_forward_f32(x, params):
    """Pure-JAX f32 reference matching the PyTorch forward."""
    h = x
    for i in range(1, 4):
        h = jnp.maximum(h @ params[f"w{i}"] + params[f"b{i}"], 0.0)
    return h @ params["w4"] + params["b4"]


if __name__ == "__main__":
    key = jax.random.PRNGKey(0)
    key, k_x1, k_x2 = jax.random.split(key, 3)

    input_dim = 32   # state-space size
    output_dim = 8   # action-space size
    params = init_dqn_params(key, input_dim, output_dim)

    # Small inference-style batch (single grid step).
    x_small = jax.random.normal(k_x1, (8, input_dim), dtype=jnp.float32)
    out_small = jax.block_until_ready(dqn_forward(x_small, params))
    assert out_small.shape == (8, output_dim)
    ref_small = _reference_forward_f32(x_small, params)
    assert jnp.allclose(out_small, ref_small, atol=2e-2, rtol=2e-2)

    # Training-style batch: exercises multiple grid steps + a ragged last tile.
    x_big = jax.random.normal(k_x2, (600, input_dim), dtype=jnp.float32)
    out_big = jax.block_until_ready(dqn_forward(x_big, params))
    assert out_big.shape == (600, output_dim)
    ref_big = _reference_forward_f32(x_big, params)
    assert jnp.allclose(out_big, ref_big, atol=2e-2, rtol=2e-2)

    print("KERNEL_OK")
</pallas_src>

<mosaic_0001>
module attributes {stable_mosaic.version = 11 : i64} {
  func.func @_dqn_kernel(%arg0: i32, %arg1: memref<8x32xf32, #tpu.memory_space<vmem>>, %arg2: memref<32x128xf32, #tpu.memory_space<vmem>>, %arg3: memref<1x128xf32, #tpu.memory_space<vmem>>, %arg4: memref<128x128xf32, #tpu.memory_space<vmem>>, %arg5: memref<1x128xf32, #tpu.memory_space<vmem>>, %arg6: memref<128x64xf32, #tpu.memory_space<vmem>>, %arg7: memref<1x64xf32, #tpu.memory_space<vmem>>, %arg8: memref<64x8xf32, #tpu.memory_space<vmem>>, %arg9: memref<1x8xf32, #tpu.memory_space<vmem>>, %arg10: memref<8x8xf32, #tpu.memory_space<vmem>>) attributes {dimension_semantics = [#tpu.dimension_semantics<parallel>], iteration_bounds = array<i64: 1>, scalar_prefetch = 0 : i64, scratch_operands = 0 : i64, tpu.core_type = #tpu.core_type<tc>, window_params = [{transform_indices = @transform_0, window_bounds = array<i64: 8, 32>}, {pipeline_mode = #tpu.pipeline_mode<synchronous>, transform_indices = @transform_1, window_bounds = array<i64: 32, 128>}, {pipeline_mode = #tpu.pipeline_mode<synchronous>, transform_indices = @transform_2, window_bounds = array<i64: 1, 128>}, {pipeline_mode = #tpu.pipeline_mode<synchronous>, transform_indices = @transform_3, window_bounds = array<i64: 128, 128>}, {pipeline_mode = #tpu.pipeline_mode<synchronous>, transform_indices = @transform_4, window_bounds = array<i64: 1, 128>}, {pipeline_mode = #tpu.pipeline_mode<synchronous>, transform_indices = @transform_5, window_bounds = array<i64: 128, 64>}, {pipeline_mode = #tpu.pipeline_mode<synchronous>, transform_indices = @transform_6, window_bounds = array<i64: 1, 64>}, {pipeline_mode = #tpu.pipeline_mode<synchronous>, transform_indices = @transform_7, window_bounds = array<i64: 64, 8>}, {pipeline_mode = #tpu.pipeline_mode<synchronous>, transform_indices = @transform_8, window_bounds = array<i64: 1, 8>}, {transform_indices = @transform_9, window_bounds = array<i64: 8, 8>}]} {
    %c0 = arith.constant 0 : index
    %c0_0 = arith.constant 0 : index
    %0 = vector.load %arg1[%c0, %c0_0] : memref<8x32xf32, #tpu.memory_space<vmem>>, vector<8x32xf32>
    %c0_1 = arith.constant 0 : index
    %c0_2 = arith.constant 0 : index
    %1 = vector.load %arg2[%c0_1, %c0_2] : memref<32x128xf32, #tpu.memory_space<vmem>>, vector<32x128xf32>
    %cst = arith.constant dense<0.000000e+00> : vector<8x128xf32>
    %2 = tpu.matmul %0, %1, %cst {dimension_numbers = #tpu.dot_dimension_numbers<[1], [0], [0], [1], [0, 0, 1, 1], [], []>} : vector<8x32xf32>, vector<32x128xf32>, vector<8x128xf32> -> vector<8x128xf32>
    %c0_3 = arith.constant 0 : index
    %c0_4 = arith.constant 0 : index
    %3 = vector.load %arg3[%c0_3, %c0_4] : memref<1x128xf32, #tpu.memory_space<vmem>>, vector<1x128xf32>
    %4 = vector.broadcast %3 : vector<1x128xf32> to vector<8x128xf32>
    %5 = arith.addf %2, %4 : vector<8x128xf32>
    %cst_5 = arith.constant 0.000000e+00 : f32
    %6 = vector.broadcast %cst_5 : f32 to vector<8x128xf32>
    %7 = arith.maximumf %5, %6 : vector<8x128xf32>
    %c0_6 = arith.constant 0 : index
    %c0_7 = arith.constant 0 : index
    %8 = vector.load %arg4[%c0_6, %c0_7] : memref<128x128xf32, #tpu.memory_space<vmem>>, vector<128x128xf32>
    %cst_8 = arith.constant dense<0.000000e+00> : vector<8x128xf32>
    %9 = tpu.matmul %7, %8, %cst_8 {dimension_numbers = #tpu.dot_dimension_numbers<[1], [0], [0], [1], [0, 0, 1, 1], [], []>} : vector<8x128xf32>, vector<128x128xf32>, vector<8x128xf32> -> vector<8x128xf32>
    %c0_9 = arith.constant 0 : index
    %c0_10 = arith.constant 0 : index
    %10 = vector.load %arg5[%c0_9, %c0_10] : memref<1x128xf32, #tpu.memory_space<vmem>>, vector<1x128xf32>
    %11 = vector.broadcast %10 : vector<1x128xf32> to vector<8x128xf32>
    %12 = arith.addf %9, %11 : vector<8x128xf32>
    %cst_11 = arith.constant 0.000000e+00 : f32
    %13 = vector.broadcast %cst_11 : f32 to vector<8x128xf32>
    %14 = arith.maximumf %12, %13 : vector<8x128xf32>
    %c0_12 = arith.constant 0 : index
    %c0_13 = arith.constant 0 : index
    %15 = vector.load %arg6[%c0_12, %c0_13] : memref<128x64xf32, #tpu.memory_space<vmem>>, vector<128x64xf32>
    %cst_14 = arith.constant dense<0.000000e+00> : vector<8x64xf32>
    %16 = tpu.matmul %14, %15, %cst_14 {dimension_numbers = #tpu.dot_dimension_numbers<[1], [0], [0], [1], [0, 0, 1, 1], [], []>} : vector<8x128xf32>, vector<128x64xf32>, vector<8x64xf32> -> vector<8x64xf32>
    %c0_15 = arith.constant 0 : index
    %c0_16 = arith.constant 0 : index
    %17 = vector.load %arg7[%c0_15, %c0_16] : memref<1x64xf32, #tpu.memory_space<vmem>>, vector<1x64xf32>
    %18 = vector.broadcast %17 : vector<1x64xf32> to vector<8x64xf32>
    %19 = arith.addf %16, %18 : vector<8x64xf32>
    %cst_17 = arith.constant 0.000000e+00 : f32
    %20 = vector.broadcast %cst_17 : f32 to vector<8x64xf32>
    %21 = arith.maximumf %19, %20 : vector<8x64xf32>
    %c0_18 = arith.constant 0 : index
    %c0_19 = arith.constant 0 : index
    %22 = vector.load %arg8[%c0_18, %c0_19] : memref<64x8xf32, #tpu.memory_space<vmem>>, vector<64x8xf32>
    %cst_20 = arith.constant dense<0.000000e+00> : vector<8x8xf32>
    %23 = tpu.matmul %21, %22, %cst_20 {dimension_numbers = #tpu.dot_dimension_numbers<[1], [0], [0], [1], [0, 0, 1, 1], [], []>} : vector<8x64xf32>, vector<64x8xf32>, vector<8x8xf32> -> vector<8x8xf32>
    %c0_21 = arith.constant 0 : index
    %c0_22 = arith.constant 0 : index
    %24 = vector.load %arg9[%c0_21, %c0_22] : memref<1x8xf32, #tpu.memory_space<vmem>>, vector<1x8xf32>
    %25 = vector.broadcast %24 : vector<1x8xf32> to vector<8x8xf32>
    %26 = arith.addf %23, %25 : vector<8x8xf32>
    %c0_23 = arith.constant 0 : index
    %c0_24 = arith.constant 0 : index
    %27 = vector.load %arg10[%c0_23, %c0_24] : memref<8x8xf32, #tpu.memory_space<vmem>>, vector<8x8xf32>
    tpu.vector_store %arg10[%c0_23, %c0_24], %26 {strides = array<i32>} : memref<8x8xf32, #tpu.memory_space<vmem>>, vector<8x8xf32>,
    return
  }
  func.func @transform_0(%arg0: i32) -> (i32, i32) {
    %c0_i32 = arith.constant 0 : i32
    %c0_i32_0 = arith.constant 0 : i32
    return %arg0, %c0_i32 : i32, i32
  }
  func.func @transform_1(%arg0: i32) -> (i32, i32) {
    %c0_i32 = arith.constant 0 : i32
    %c0_i32_0 = arith.constant 0 : i32
    %c0_i32_1 = arith.constant 0 : i32
    return %c0_i32, %c0_i32_0 : i32, i32
  }
  func.func @transform_2(%arg0: i32) -> (i32, i32) {
    %c0_i32 = arith.constant 0 : i32
    %c0_i32_0 = arith.constant 0 : i32
    %c0_i32_1 = arith.constant 0 : i32
    return %c0_i32, %c0_i32_0 : i32, i32
  }
  func.func @transform_3(%arg0: i32) -> (i32, i32) {
    %c0_i32 = arith.constant 0 : i32
    %c0_i32_0 = arith.constant 0 : i32
    %c0_i32_1 = arith.constant 0 : i32
    return %c0_i32, %c0_i32_0 : i32, i32
  }
  func.func @transform_4(%arg0: i32) -> (i32, i32) {
    %c0_i32 = arith.constant 0 : i32
    %c0_i32_0 = arith.constant 0 : i32
    %c0_i32_1 = arith.constant 0 : i32
    return %c0_i32, %c0_i32_0 : i32, i32
  }
  func.func @transform_5(%arg0: i32) -> (i32, i32) {
    %c0_i32 = arith.constant 0 : i32
    %c0_i32_0 = arith.constant 0 : i32
    %c0_i32_1 = arith.constant 0 : i32
    return %c0_i32, %c0_i32_0 : i32, i32
  }
  func.func @transform_6(%arg0: i32) -> (i32, i32) {
    %c0_i32 = arith.constant 0 : i32
    %c0_i32_0 = arith.constant 0 : i32
    %c0_i32_1 = arith.constant 0 : i32
    return %c0_i32, %c0_i32_0 : i32, i32
  }
  func.func @transform_7(%arg0: i32) -> (i32, i32) {
    %c0_i32 = arith.constant 0 : i32
    %c0_i32_0 = arith.constant 0 : i32
    %c0_i32_1 = arith.constant 0 : i32
    return %c0_i32, %c0_i32_0 : i32, i32
  }
  func.func @transform_8(%arg0: i32) -> (i32, i32) {
    %c0_i32 = arith.constant 0 : i32
    %c0_i32_0 = arith.constant 0 : i32
    %c0_i32_1 = arith.constant 0 : i32
    return %c0_i32, %c0_i32_0 : i32, i32
  }
  func.func @transform_9(%arg0: i32) -> (i32, i32) {
    %c0_i32 = arith.constant 0 : i32
    %c0_i32_0 = arith.constant 0 : i32
    return %arg0, %c0_i32 : i32, i32
  }
}

</mosaic_0001>

<llo_original>
// kernel: tpu_custom_call.1
$region0: #{tpu_custom_call.1}
  #allocation0 [shape = 'u32[]', space=smem, size = 0x4, offset = 0x4, fixed_abs, tag = 'smem constant byte address 0x4 - core index']
  #allocation1 [shape = 'u32[72,128]{1,0:T(1,128)}', space=vmem, size = 0x9000, scoped, tag = 'internal scratch']
  %s0 = inlined_call_operand.vmem [shape: f32[8,32], index: 0, kind: input, shape index: {}]
  %s1 = inlined_call_operand.vmem [shape: f32[32,128], index: 1, kind: input, shape index: {}]
  %s2 = inlined_call_operand.vmem [shape: f32[1,128], index: 2, kind: input, shape index: {}]
  %s3 = inlined_call_operand.vmem [shape: f32[128,128], index: 3, kind: input, shape index: {}]
  %s4 = inlined_call_operand.vmem [shape: f32[1,128], index: 4, kind: input, shape index: {}]
  %s5 = inlined_call_operand.vmem [shape: f32[128,64], index: 5, kind: input, shape index: {}]
  %s6 = inlined_call_operand.vmem [shape: f32[1,64], index: 6, kind: input, shape index: {}]
  %s7 = inlined_call_operand.vmem [shape: f32[64,8], index: 7, kind: input, shape index: {}]
  %s8 = inlined_call_operand.vmem [shape: f32[1,8], index: 8, kind: input, shape index: {}]
  %s9 = inlined_call_operand.hbm [shape: f32[8,8], index: 9, kind: output, shape index: {}]
  %s10 = sld [smem:[#allocation0]]
  $region46: #{tpu_custom_call.1} parent=0
    _
  %s12 = ssub.s32 1, %s10
  %s13 = scalar_select 0, %s12, %s10
  $region1: #{tpu_custom_call.1} parent=0
    #allocation2 [shape = 'u8[4096]{0}', space=vmem, size = 0x1000, scoped, tag = 'output window, operand 0, single buffered']
    #allocation3 [shape = 's32[1]{0}', space=sflag, size = 0x4, scoped, tag = 'scoped memory for tpu_custom_call.1']
    %14 = vsyncpa [#allocation3], 0
    // Predicated region
    $region2: #{tpu_custom_call.1} parent=1 // pred_check
      _
    $region3: #{tpu_custom_call.1} parent=1 // pred_check_branch
      %16 = sbr.rel (0) target = $region5
    $region4: #{tpu_custom_call.1} parent=1 // pred_region
      _
    $region5: #{tpu_custom_call.1} parent=1 // pred_fallthru
      _
    // Predicated region
    $region6: #{tpu_custom_call.1} parent=1 // pred_check
      _
    $region7: #{tpu_custom_call.1} parent=1 // pred_check_branch
      %18 = sbr.rel (0) target = $region9
    $region8: #{tpu_custom_call.1} parent=1 // pred_region
      _
    $region9: #{tpu_custom_call.1} parent=1 // pred_fallthru
      _
    // Predicated region
    $region10: #{tpu_custom_call.1} parent=1 // pred_check
      _
    $region11: #{tpu_custom_call.1} parent=1 // pred_check_branch
      %20 = sbr.rel (0) target = $region13
    $region12: #{tpu_custom_call.1} parent=1 // pred_region
      _
    $region13: #{tpu_custom_call.1} parent=1 // pred_fallthru
      _
    // Predicated region
    $region14: #{tpu_custom_call.1} parent=1 // pred_check
      _
    $region15: #{tpu_custom_call.1} parent=1 // pred_check_branch
      %22 = sbr.rel (0) target = $region17
    $region16: #{tpu_custom_call.1} parent=1 // pred_region
      _
    $region17: #{tpu_custom_call.1} parent=1 // pred_fallthru
      _
    // Predicated region
    $region18: #{tpu_custom_call.1} parent=1 // pred_check
      _
    $region19: #{tpu_custom_call.1} parent=1 // pred_check_branch
      %24 = sbr.rel (0) target = $region21
    $region20: #{tpu_custom_call.1} parent=1 // pred_region
      _
    $region21: #{tpu_custom_call.1} parent=1 // pred_fallthru
      _
    // Predicated region
    $region22: #{tpu_custom_call.1} parent=1 // pred_check
      _
    $region23: #{tpu_custom_call.1} parent=1 // pred_check_branch
      %26 = sbr.rel (0) target = $region25
    $region24: #{tpu_custom_call.1} parent=1 // pred_region
      _
    $region25: #{tpu_custom_call.1} parent=1 // pred_fallthru
      _
    // Predicated region
    $region26: #{tpu_custom_call.1} parent=1 // pred_check
      _
    $region27: #{tpu_custom_call.1} parent=1 // pred_check_branch
      %28 = sbr.rel (0) target = $region29
    $region28: #{tpu_custom_call.1} parent=1 // pred_region
      _
    $region29: #{tpu_custom_call.1} parent=1 // pred_fallthru
      _
    // Predicated region
    $region30: #{tpu_custom_call.1} parent=1 // pred_check
      _
    $region31: #{tpu_custom_call.1} parent=1 // pred_check_branch
      %30 = sbr.rel (0) target = $region33
    $region32: #{tpu_custom_call.1} parent=1 // pred_region
      _
    $region33: #{tpu_custom_call.1} parent=1 // pred_fallthru
      _
    // Predicated region
    $region34: #{tpu_custom_call.1} parent=1 // pred_check
      _
    $region35: #{tpu_custom_call.1} parent=1 // pred_check_branch
      %32 = sbr.rel (0) target = $region37
    $region36: #{tpu_custom_call.1} parent=1 // pred_region
      _
    $region37: #{tpu_custom_call.1} parent=1 // pred_fallthru
      _
    %v33 = vld [vmem:[%s0] sm:$0xff]
    %v34 = vld [vmem:[%s1] sm:$0xff]
    %v35 = vld [vmem:[%s1 + $0x8] sm:$0xff]
    %v36 = vld [vmem:[%s1 + $0x10] sm:$0xff]
    %v37 = vld [vmem:[%s1 + $0x18] sm:$0xff]
    %v38 = vld [vmem:[%s2] sm:$0x1]
    %v40 = vperm.slane %v38, 0
    %vm42 = vcmask 261120
    %v44 = vsel %vm42, %v33, 0
    %46 = vmatpush.msra.mxu0 0.0
    %47 = vmatpush.msra.mxu0 0.0
    %48 = vmatpush.msra.mxu0 0.0
    %49 = vmatpush.msra.mxu0 0.0
    %50 = vmatpush.msra.mxu0 0.0
    %51 = vmatpush.msra.mxu0 0.0
    %52 = vmatpush.msra.mxu0 0.0
    %53 = vmatpush.msra.mxu0 0.0
    %54 = vmatpush.msra.mxu0 0.0
    %55 = vmatpush.msra.mxu0 0.0
    %56 = vmatpush.msra.mxu0 0.0
    %57 = vmatpush.msra.mxu0 0.0
    %58 = vmatpush.msra.mxu0 %v37
    %59 = vmatpush.msra.mxu0 %v36
    %60 = vmatpush.msra.mxu0 %v35
    %61 = vmatpush.msra.mxu0 %v34
    %62 = vmatmul.f32.gmra.mxu0 %v44
    %v63 = vpop.f32.mrf.mxu0
    %v64 = vadd.f32 %v40, %v63
    %65 = vdwg.mxu0
    %v66 = vmax.f32 %v64, 0.0
    %v67 = vld [vmem:[%s3] sm:$0xff]
    %v68 = vld [vmem:[%s3 + $0x8] sm:$0xff]
    %v69 = vld [vmem:[%s3 + $0x10] sm:$0xff]
    %v70 = vld [vmem:[%s3 + $0x18] sm:$0xff]
    %v71 = vld [vmem:[%s3 + $0x20] sm:$0xff]
    %v72 = vld [vmem:[%s3 + $0x28] sm:$0xff]
    %v73 = vld [vmem:[%s3 + $0x30] sm:$0xff]
    %v74 = vld [vmem:[%s3 + $0x38] sm:$0xff]
    %v75 = vld [vmem:[%s3 + $0x40] sm:$0xff]
    %v76 = vld [vmem:[%s3 + $0x48] sm:$0xff]
    %v77 = vld [vmem:[%s3 + $0x50] sm:$0xff]
    %v78 = vld [vmem:[%s3 + $0x58] sm:$0xff]
    %v79 = vld [vmem:[%s3 + $0x60] sm:$0xff]
    %v80 = vld [vmem:[%s3 + $0x68] sm:$0xff]
    %v81 = vld [vmem:[%s3 + $0x70] sm:$0xff]
    %v82 = vld [vmem:[%s3 + $0x78] sm:$0xff]
    %v83 = vld [vmem:[%s4] sm:$0x1]
    %v85 = vperm.slane %v83, 0
    %87 = vmatpush.msra.mxu0 %v82
    %88 = vmatpush.msra.mxu0 %v81
    %89 = vmatpush.msra.mxu0 %v80
    %90 = vmatpush.msra.mxu0 %v79
    %91 = vmatpush.msra.mxu0 %v78
    %92 = vmatpush.msra.mxu0 %v77
    %93 = vmatpush.msra.mxu0 %v76
    %94 = vmatpush.msra.mxu0 %v75
    %95 = vmatpush.msra.mxu0 %v74
    %96 = vmatpush.msra.mxu0 %v73
    %97 = vmatpush.msra.mxu0 %v72
    %98 = vmatpush.msra.mxu0 %v71
    %99 = vmatpush.msra.mxu0 %v70
    %100 = vmatpush.msra.mxu0 %v69
    %101 = vmatpush.msra.mxu0 %v68
    %102 = vmatpush.msra.mxu0 %v67
    %103 = vmatmul.f32.gmra.mxu0 %v66
    %v104 = vpop.f32.mrf.mxu0
    %v105 = vadd.f32 %v85, %v104
    %106 = vdwg.mxu0
    %v107 = vmax.f32 %v105, 0.0
    %v108 = vld [vmem:[%s5] sm:$0xff]
    %v109 = vld [vmem:[%s5 + $0x8] sm:$0xff]
    %v110 = vld [vmem:[%s5 + $0x10] sm:$0xff]
    %v111 = vld [vmem:[%s5 + $0x18] sm:$0xff]
    %v112 = vld [vmem:[%s5 + $0x20] sm:$0xff]
    %v113 = vld [vmem:[%s5 + $0x28] sm:$0xff]
    %v114 = vld [vmem:[%s5 + $0x30] sm:$0xff]
    %v115 = vld [vmem:[%s5 + $0x38] sm:$0xff]
    %v116 = vld [vmem:[%s5 + $0x40] sm:$0xff]
    %v117 = vld [vmem:[%s5 + $0x48] sm:$0xff]
    %v118 = vld [vmem:[%s5 + $0x50] sm:$0xff]
    %v119 = vld [vmem:[%s5 + $0x58] sm:$0xff]
    %v120 = vld [vmem:[%s5 + $0x60] sm:$0xff]
    %v121 = vld [vmem:[%s5 + $0x68] sm:$0xff]
    %v122 = vld [vmem:[%s5 + $0x70] sm:$0xff]
    %v123 = vld [vmem:[%s5 + $0x78] sm:$0xff]
    %v124 = vld [vmem:[%s6] sm:$0x1]
    %v126 = vperm.slane %v124, 0
    %128 = vmatpush.msra.mxu0 %v123
    %129 = vmatpush.msra.mxu0 %v122
    %130 = vmatpush.msra.mxu0 %v121
    %131 = vmatpush.msra.mxu0 %v120
    %132 = vmatpush.msra.mxu0 %v119
    %133 = vmatpush.msra.mxu0 %v118
    %134 = vmatpush.msra.mxu0 %v117
    %135 = vmatpush.msra.mxu0 %v116
    %136 = vmatpush.msra.mxu0 %v115
    %137 = vmatpush.msra.mxu0 %v114
    %138 = vmatpush.msra.mxu0 %v113
    %139 = vmatpush.msra.mxu0 %v112
    %140 = vmatpush.msra.mxu0 %v111
    %141 = vmatpush.msra.mxu0 %v110
    %142 = vmatpush.msra.mxu0 %v109
    %143 = vmatpush.msra.mxu0 %v108
    %144 = vmatmul.f32.gmra.mxu0 %v107
    %v145 = vpop.f32.mrf.mxu0
    %v146 = vadd.f32 %v126, %v145
    %147 = vdwg.mxu0
    %v148 = vmax.f32 %v146, 0.0
    %v149 = vld [vmem:[%s7] sm:$0xff]
    %v150 = vld [vmem:[%s7 + $0x8] sm:$0xff]
    %v151 = vld [vmem:[%s7 + $0x10] sm:$0xff]
    %v152 = vld [vmem:[%s7 + $0x18] sm:$0xff]
    %v153 = vld [vmem:[%s7 + $0x20] sm:$0xff]
    %v154 = vld [vmem:[%s7 + $0x28] sm:$0xff]
    %v155 = vld [vmem:[%s7 + $0x30] sm:$0xff]
    %v156 = vld [vmem:[%s7 + $0x38] sm:$0xff]
    %v157 = vld [vmem:[%s8] sm:$0x1]
    %v159 = vperm.slane %v157, 0
    %vm161 = vcmask 523264
    %v163 = vsel %vm161, %v148, 0
    %165 = vmatpush.msra.mxu0 0.0
    %166 = vmatpush.msra.mxu0 0.0
    %167 = vmatpush.msra.mxu0 0.0
    %168 = vmatpush.msra.mxu0 0.0
    %169 = vmatpush.msra.mxu0 0.0
    %170 = vmatpush.msra.mxu0 0.0
    %171 = vmatpush.msra.mxu0 0.0
    %172 = vmatpush.msra.mxu0 0.0
    %173 = vmatpush.msra.mxu0 %v156
    %174 = vmatpush.msra.mxu0 %v155
    %175 = vmatpush.msra.mxu0 %v154
    %176 = vmatpush.msra.mxu0 %v153
    %177 = vmatpush.msra.mxu0 %v152
    %178 = vmatpush.msra.mxu0 %v151
    %179 = vmatpush.msra.mxu0 %v150
    %180 = vmatpush.msra.mxu0 %v149
    %181 = vmatmul.f32.gmra.mxu0 %v163
    %v182 = vpop.f32.mrf.mxu0
    %v183 = vadd.f32 %v159, %v182
    %184 = vdwg.mxu0
    %vm185 = vcmask 64512
    %186 = vst.msk [vmem:[#allocation2] sm:$0xff] %vm185, %v183
    // Predicated region
    $region38: #{tpu_custom_call.1} parent=1 // pred_check
      _
    $region39: #{tpu_custom_call.1} parent=1 // pred_check_branch
      %188 = sbr.rel (0) target = $region41
    $region40: #{tpu_custom_call.1} parent=1 // pred_region
      %190 = vsyncadd [#allocation3], 0
      %s192 = sshll.u32 [#allocation2], 4
      %s193 = int_to_ptr.vmem [resolvable:$true] %s192
      %s194 = sshll.u32 %s9, 4
      %s195 = int_to_ptr.hbm [resolvable:$true] %s194
      %197 = dma.vmem_to_hbm [thread:$0]  %s193, 128, %s195, [#allocation3]
    $region41: #{tpu_custom_call.1} parent=1 // pred_fallthru
      _
    // Predicated region
    $region42: #{tpu_custom_call.1} parent=1 // pred_check
      _
    $region43: #{tpu_custom_call.1} parent=1 // pred_check_branch
      %199 = sbr.rel (0) target = $region45
    $region44: #{tpu_custom_call.1} parent=1 // pred_region
      %201 = dma.done [#allocation3], 128
    $region45: #{tpu_custom_call.1} parent=1 // pred_fallthru
      _
    %202 = vsyncpa [#allocation3], 1

</llo_original>
